<compile_context>
chip_gen: v6e
topology: v6e:2x2x1
jax: 0.10.0
libtpu: 0.0.40
codegen_flags: <defaults>
</compile_context>

<pallas_src>
import math

import jax
import jax.numpy as jnp
from jax.experimental import pallas as pl
from jax.experimental.pallas import tpu as pltpu


def _round_up(x, m):
    return ((x + m - 1) // m) * m


def valuenet_kernel(x_ref, a_ref, w1x_ref, w1a_ref, b1_ref, w2_ref, b2_ref,
                    wo_ref, bo_ref, out_ref):
    # Layer 1: Linear(obs+act -> H1) + ReLU; concat fused as two bf16 MXU dots, f32 accum.
    h = jnp.dot(x_ref[...].astype(jnp.bfloat16), w1x_ref[...],
                preferred_element_type=jnp.float32)
    h = h + jnp.dot(a_ref[...].astype(jnp.bfloat16), w1a_ref[...],
                    preferred_element_type=jnp.float32)
    h = jnp.maximum(h + b1_ref[...], 0.0)
    # Layer 2: Linear(H1 -> H2) + ReLU.
    h = jnp.dot(h.astype(jnp.bfloat16), w2_ref[...],
                preferred_element_type=jnp.float32)
    h = jnp.maximum(h + b2_ref[...], 0.0)
    # critic_out: Linear(H2 -> 1) as VPU mul + XLU lane reduction; lane-dense (1, TB) store.
    val = jnp.sum(h * wo_ref[...], axis=-1) + bo_ref[0]
    out_ref[...] = val[None, :]


def value_net_forward(x, a, params, *, tb=1024):
    """x: (B, obs_dim), a: (B, act_dim) -> (B, 1) float32."""
    w1x, w1a, b1, w2, b2, wo_row, bo = params
    B, obs_dim = x.shape
    act_dim = a.shape[1]
    h1 = w1x.shape[1]
    h2 = w2.shape[1]

    # Batch tile: large multiple of 8 (amortizes ~0.35us/step), capped by padded batch.
    TB = min(tb, _round_up(B, 8))
    B_pad = _round_up(B, TB)
    if B_pad != B:
        x = jnp.pad(x, ((0, B_pad - B), (0, 0)))
        a = jnp.pad(a, ((0, B_pad - B), (0, 0)))
    grid = (B_pad // TB,)

    # Weights/biases: constant index_map -> resident in VMEM, no per-step re-DMA.
    resident = lambda s: pl.BlockSpec(s, lambda i, _s=s: (0,) * len(_s))

    out2d = pl.pallas_call(
        valuenet_kernel,
        out_shape=jax.ShapeDtypeStruct((1, B_pad), jnp.float32),
        grid=grid,
        in_specs=[
            pl.BlockSpec((TB, obs_dim), lambda i: (i, 0)),      # x: streamed over batch
            pl.BlockSpec((TB, act_dim), lambda i: (i, 0)),      # a: streamed over batch
            resident((obs_dim, h1)),                            # w1x (bf16)
            resident((act_dim, h1)),                            # w1a (bf16)
            resident((1, h1)),                                  # b1  (f32)
            resident((h1, h2)),                                 # w2  (bf16)
            resident((1, h2)),                                  # b2  (f32)
            resident((1, h2)),                                  # wo row (f32, VPU path)
            pl.BlockSpec(memory_space=pltpu.MemorySpace.SMEM),  # bo scalar in SMEM
        ],
        out_specs=pl.BlockSpec((1, TB), lambda i: (0, i)),      # lane-dense output slab
        compiler_params=pltpu.CompilerParams(
            dimension_semantics=("parallel",),                  # megacore split on v7x
            vmem_limit_bytes=32 * 1024 * 1024,
        ),
    )(x, a, w1x, w1a, b1, w2, b2, wo_row, bo)
    return out2d[0, :B, None]


def init_linear(key, fan_in, fan_out):
    """torch.nn.Linear-style init (uniform +-1/sqrt(fan_in)); weight stored (in, out)."""
    kw, kb = jax.random.split(key)
    bound = 1.0 / math.sqrt(fan_in)
    w = jax.random.uniform(kw, (fan_in, fan_out), jnp.float32, -bound, bound)
    b = jax.random.uniform(kb, (1, fan_out), jnp.float32, -bound, bound)
    return w, b


def make_params(key, observation_dim, action_dim, hidden_layers):
    # Kernel is specialized to the 2-hidden-layer config used by this module instance.
    assert len(hidden_layers) == 2
    k1, k2, k3 = jax.random.split(key, 3)
    in_dim = observation_dim + action_dim
    w1, b1 = init_linear(k1, in_dim, hidden_layers[0])
    w2, b2 = init_linear(k2, hidden_layers[0], hidden_layers[1])
    wo, bo = init_linear(k3, hidden_layers[1], 1)
    # Split layer-1 weight so the wrapper never materializes concat([x, a]) in HBM.
    w1x = w1[:observation_dim].astype(jnp.bfloat16)
    w1a = w1[observation_dim:].astype(jnp.bfloat16)
    return (w1x, w1a, b1,
            w2.astype(jnp.bfloat16), b2,
            jnp.reshape(wo, (1, hidden_layers[1])),  # critic weight as lane row
            jnp.reshape(bo, (1,)))                   # scalar bias for SMEM


if __name__ == "__main__":
    observation_dim = 16
    action_dim = 8
    hidden_layers = [32, 32]
    batch = 8

    key = jax.random.PRNGKey(0)
    k_x, k_a, k_p = jax.random.split(key, 3)
    x = jax.random.normal(k_x, (batch, observation_dim), jnp.float32)
    a = jax.random.normal(k_a, (batch, action_dim), jnp.float32)
    params = make_params(k_p, observation_dim, action_dim, hidden_layers)

    out = jax.block_until_ready(value_net_forward(x, a, params))

    # Pure-JAX reference using the same bf16-matmul / f32-accumulate recipe.
    w1x, w1a, b1, w2, b2, wo_row, bo = params
    h = (jnp.dot(x.astype(jnp.bfloat16), w1x, preferred_element_type=jnp.float32)
         + jnp.dot(a.astype(jnp.bfloat16), w1a, preferred_element_type=jnp.float32))
    h = jnp.maximum(h + b1, 0.0)
    h = jnp.dot(h.astype(jnp.bfloat16), w2, preferred_element_type=jnp.float32)
    h = jnp.maximum(h + b2, 0.0)
    ref = jnp.sum(h * wo_row, axis=-1, keepdims=True) + bo

    assert out.shape == (batch, 1)
    err = jnp.max(jnp.abs(out - ref))
    assert jnp.allclose(out, ref, atol=2e-4, rtol=2e-3), f"max abs err {err}"

    print("KERNEL_OK")
</pallas_src>

<mosaic_0001>
module attributes {stable_mosaic.version = 11 : i64} {
  func.func @valuenet_kernel(%arg0: i32, %arg1: memref<8x16xf32, #tpu.memory_space<vmem>>, %arg2: memref<8x8xf32, #tpu.memory_space<vmem>>, %arg3: memref<16x32xbf16, #tpu.memory_space<vmem>>, %arg4: memref<8x32xbf16, #tpu.memory_space<vmem>>, %arg5: memref<1x32xf32, #tpu.memory_space<vmem>>, %arg6: memref<32x32xbf16, #tpu.memory_space<vmem>>, %arg7: memref<1x32xf32, #tpu.memory_space<vmem>>, %arg8: memref<1x32xf32, #tpu.memory_space<vmem>>, %arg9: memref<1xf32, #tpu.memory_space<smem>>, %arg10: memref<1x8xf32, #tpu.memory_space<vmem>>) attributes {dimension_semantics = [#tpu.dimension_semantics<parallel>], iteration_bounds = array<i64: 1>, scalar_prefetch = 0 : i64, scratch_operands = 0 : i64, tpu.core_type = #tpu.core_type<tc>, window_params = [{transform_indices = @transform_0, window_bounds = array<i64: 8, 16>}, {transform_indices = @transform_1, window_bounds = array<i64: 8, 8>}, {pipeline_mode = #tpu.pipeline_mode<synchronous>, transform_indices = @transform_2, window_bounds = array<i64: 16, 32>}, {pipeline_mode = #tpu.pipeline_mode<synchronous>, transform_indices = @transform_3, window_bounds = array<i64: 8, 32>}, {pipeline_mode = #tpu.pipeline_mode<synchronous>, transform_indices = @transform_4, window_bounds = array<i64: 1, 32>}, {pipeline_mode = #tpu.pipeline_mode<synchronous>, transform_indices = @transform_5, window_bounds = array<i64: 32, 32>}, {pipeline_mode = #tpu.pipeline_mode<synchronous>, transform_indices = @transform_6, window_bounds = array<i64: 1, 32>}, {pipeline_mode = #tpu.pipeline_mode<synchronous>, transform_indices = @transform_7, window_bounds = array<i64: 1, 32>}, {transform_indices = @transform_8, window_bounds = array<i64: 1>}, {transform_indices = @transform_9, window_bounds = array<i64: 1, 8>}]} {
    %c0 = arith.constant 0 : index
    %c0_0 = arith.constant 0 : index
    %0 = vector.load %arg1[%c0, %c0_0] : memref<8x16xf32, #tpu.memory_space<vmem>>, vector<8x16xf32>
    %1 = arith.truncf %0 : vector<8x16xf32> to vector<8x16xbf16>
    %c0_1 = arith.constant 0 : index
    %c0_2 = arith.constant 0 : index
    %2 = vector.load %arg3[%c0_1, %c0_2] : memref<16x32xbf16, #tpu.memory_space<vmem>>, vector<16x32xbf16>
    %cst = arith.constant dense<0.000000e+00> : vector<8x32xf32>
    %3 = tpu.matmul %1, %2, %cst {dimension_numbers = #tpu.dot_dimension_numbers<[1], [0], [0], [1], [0, 0, 1, 1], [], []>} : vector<8x16xbf16>, vector<16x32xbf16>, vector<8x32xf32> -> vector<8x32xf32>
    %c0_3 = arith.constant 0 : index
    %c0_4 = arith.constant 0 : index
    %4 = vector.load %arg2[%c0_3, %c0_4] : memref<8x8xf32, #tpu.memory_space<vmem>>, vector<8x8xf32>
    %5 = arith.truncf %4 : vector<8x8xf32> to vector<8x8xbf16>
    %c0_5 = arith.constant 0 : index
    %c0_6 = arith.constant 0 : index
    %6 = vector.load %arg4[%c0_5, %c0_6] : memref<8x32xbf16, #tpu.memory_space<vmem>>, vector<8x32xbf16>
    %cst_7 = arith.constant dense<0.000000e+00> : vector<8x32xf32>
    %7 = tpu.matmul %5, %6, %cst_7 {dimension_numbers = #tpu.dot_dimension_numbers<[1], [0], [0], [1], [0, 0, 1, 1], [], []>} : vector<8x8xbf16>, vector<8x32xbf16>, vector<8x32xf32> -> vector<8x32xf32>
    %8 = arith.addf %3, %7 : vector<8x32xf32>
    %c0_8 = arith.constant 0 : index
    %c0_9 = arith.constant 0 : index
    %9 = vector.load %arg5[%c0_8, %c0_9] : memref<1x32xf32, #tpu.memory_space<vmem>>, vector<1x32xf32>
    %10 = vector.broadcast %9 : vector<1x32xf32> to vector<8x32xf32>
    %11 = arith.addf %8, %10 : vector<8x32xf32>
    %cst_10 = arith.constant 0.000000e+00 : f32
    %12 = vector.broadcast %cst_10 : f32 to vector<8x32xf32>
    %13 = arith.maximumf %11, %12 : vector<8x32xf32>
    %14 = arith.truncf %13 : vector<8x32xf32> to vector<8x32xbf16>
    %c0_11 = arith.constant 0 : index
    %c0_12 = arith.constant 0 : index
    %15 = vector.load %arg6[%c0_11, %c0_12] : memref<32x32xbf16, #tpu.memory_space<vmem>>, vector<32x32xbf16>
    %cst_13 = arith.constant dense<0.000000e+00> : vector<8x32xf32>
    %16 = tpu.matmul %14, %15, %cst_13 {dimension_numbers = #tpu.dot_dimension_numbers<[1], [0], [0], [1], [0, 0, 1, 1], [], []>} : vector<8x32xbf16>, vector<32x32xbf16>, vector<8x32xf32> -> vector<8x32xf32>
    %c0_14 = arith.constant 0 : index
    %c0_15 = arith.constant 0 : index
    %17 = vector.load %arg7[%c0_14, %c0_15] : memref<1x32xf32, #tpu.memory_space<vmem>>, vector<1x32xf32>
    %18 = vector.broadcast %17 : vector<1x32xf32> to vector<8x32xf32>
    %19 = arith.addf %16, %18 : vector<8x32xf32>
    %cst_16 = arith.constant 0.000000e+00 : f32
    %20 = vector.broadcast %cst_16 : f32 to vector<8x32xf32>
    %21 = arith.maximumf %19, %20 : vector<8x32xf32>
    %c0_17 = arith.constant 0 : index
    %c0_18 = arith.constant 0 : index
    %22 = vector.load %arg8[%c0_17, %c0_18] : memref<1x32xf32, #tpu.memory_space<vmem>>, vector<1x32xf32>
    %23 = vector.broadcast %22 : vector<1x32xf32> to vector<8x32xf32>
    %24 = arith.mulf %21, %23 : vector<8x32xf32>
    %cst_19 = arith.constant dense<0.000000e+00> : vector<8xf32>
    %25 = vector.multi_reduction <add>, %24, %cst_19 [1] : vector<8x32xf32> to vector<8xf32>
    %c0_20 = arith.constant 0 : index
    %26 = memref.load %arg9[%c0_20] : memref<1xf32, #tpu.memory_space<smem>>
    %27 = vector.broadcast %26 : f32 to vector<8xf32>
    %28 = arith.addf %25, %27 : vector<8xf32>
    %29 = vector.shape_cast %28 : vector<8xf32> to vector<1x8xf32>
    %c0_21 = arith.constant 0 : index
    %c0_22 = arith.constant 0 : index
    %30 = vector.load %arg10[%c0_21, %c0_22] : memref<1x8xf32, #tpu.memory_space<vmem>>, vector<1x8xf32>
    tpu.vector_store %arg10[%c0_21, %c0_22], %29 {strides = array<i32>} : memref<1x8xf32, #tpu.memory_space<vmem>>, vector<1x8xf32>,
    return
  }
  func.func @transform_0(%arg0: i32) -> (i32, i32) {
    %c0_i32 = arith.constant 0 : i32
    %c0_i32_0 = arith.constant 0 : i32
    return %arg0, %c0_i32 : i32, i32
  }
  func.func @transform_1(%arg0: i32) -> (i32, i32) {
    %c0_i32 = arith.constant 0 : i32
    %c0_i32_0 = arith.constant 0 : i32
    return %arg0, %c0_i32 : i32, i32
  }
  func.func @transform_2(%arg0: i32) -> (i32, i32) {
    %c0_i32 = arith.constant 0 : i32
    %c0_i32_0 = arith.constant 0 : i32
    %c0_i32_1 = arith.constant 0 : i32
    return %c0_i32, %c0_i32_0 : i32, i32
  }
  func.func @transform_3(%arg0: i32) -> (i32, i32) {
    %c0_i32 = arith.constant 0 : i32
    %c0_i32_0 = arith.constant 0 : i32
    %c0_i32_1 = arith.constant 0 : i32
    return %c0_i32, %c0_i32_0 : i32, i32
  }
  func.func @transform_4(%arg0: i32) -> (i32, i32) {
    %c0_i32 = arith.constant 0 : i32
    %c0_i32_0 = arith.constant 0 : i32
    %c0_i32_1 = arith.constant 0 : i32
    return %c0_i32, %c0_i32_0 : i32, i32
  }
  func.func @transform_5(%arg0: i32) -> (i32, i32) {
    %c0_i32 = arith.constant 0 : i32
    %c0_i32_0 = arith.constant 0 : i32
    %c0_i32_1 = arith.constant 0 : i32
    return %c0_i32, %c0_i32_0 : i32, i32
  }
  func.func @transform_6(%arg0: i32) -> (i32, i32) {
    %c0_i32 = arith.constant 0 : i32
    %c0_i32_0 = arith.constant 0 : i32
    %c0_i32_1 = arith.constant 0 : i32
    return %c0_i32, %c0_i32_0 : i32, i32
  }
  func.func @transform_7(%arg0: i32) -> (i32, i32) {
    %c0_i32 = arith.constant 0 : i32
    %c0_i32_0 = arith.constant 0 : i32
    %c0_i32_1 = arith.constant 0 : i32
    return %c0_i32, %c0_i32_0 : i32, i32
  }
  func.func @transform_8(%arg0: i32) -> i32 {
    %c0_i32 = arith.constant 0 : i32
    %c0_i32_0 = arith.constant 0 : i32
    return %c0_i32 : i32
  }
  func.func @transform_9(%arg0: i32) -> (i32, i32) {
    %c0_i32 = arith.constant 0 : i32
    %c0_i32_0 = arith.constant 0 : i32
    return %c0_i32, %arg0 : i32, i32
  }
}

</mosaic_0001>

<llo_original>
// kernel: tpu_custom_call.1
$region0: #{tpu_custom_call.1}
  #allocation0 [shape = 'u32[]', space=smem, size = 0x4, offset = 0x4, fixed_abs, tag = 'smem constant byte address 0x4 - core index']
  #allocation1 [shape = 'u32[144,128]{1,0:T(1,128)}', space=vmem, size = 0x12000, scoped, tag = 'internal scratch']
  #allocation2 [shape = 'f32[1]{0:T(128)S(6)}', space=smem, size = 0x200, scoped, tag = 'scoped memory for tpu_custom_call.1']
  %s0 = inlined_call_operand.hbm [shape: f32[8,16], index: 0, kind: input, shape index: {}]
  %s1 = inlined_call_operand.hbm [shape: f32[8,8], index: 1, kind: input, shape index: {}]
  %s2 = inlined_call_operand.hbm [shape: bf16[16,32], index: 2, kind: input, shape index: {}]
  %s3 = inlined_call_operand.vmem [shape: bf16[8,32], index: 3, kind: input, shape index: {}]
  %s4 = inlined_call_operand.vmem [shape: f32[1,32], index: 4, kind: input, shape index: {}]
  %s5 = inlined_call_operand.hbm [shape: bf16[32,32], index: 5, kind: input, shape index: {}]
  %s6 = inlined_call_operand.vmem [shape: f32[1,32], index: 6, kind: input, shape index: {}]
  %s7 = inlined_call_operand.vmem [shape: f32[1,32], index: 7, kind: input, shape index: {}]
  %s8 = inlined_call_operand.<no memory space> [shape: f32[1], index: 8, kind: input, shape index: {}]
  %s9 = inlined_call_operand.hbm [shape: f32[1,8], index: 9, kind: output, shape index: {}]
  %s10 = sld [smem:[#allocation0]]
  $region62: #{tpu_custom_call.1} parent=0
    _
  %s12 = ssub.s32 1, %s10
  %s13 = scalar_select 0, %s12, %s10
  %14 = sst [smem:[#allocation2]] %s8
  $region1: #{tpu_custom_call.1} parent=0
    #allocation3 [shape = 'u8[4096]{0}', space=vmem, size = 0x1000, scoped, tag = 'input window, operand 0, single buffered']
    #allocation4 [shape = 's32[1]{0}', space=sflag, size = 0x4, scoped, tag = 'scoped memory for tpu_custom_call.1']
    #allocation5 [shape = 's32[1]{0}', space=sflag, size = 0x4, scoped, tag = 'scoped memory for tpu_custom_call.1']
    #allocation6 [shape = 'u8[4096]{0}', space=vmem, size = 0x1000, scoped, tag = 'input window, operand 1, single buffered']
    #allocation7 [shape = 's32[1]{0}', space=sflag, size = 0x4, scoped, tag = 'scoped memory for tpu_custom_call.1']
    #allocation8 [shape = 'u8[4096]{0}', space=vmem, size = 0x1000, scoped, tag = 'input window, operand 2, single buffered']
    #allocation9 [shape = 'u8[8192]{0}', space=vmem, size = 0x2000, scoped, tag = 'input window, operand 5, single buffered']
    #allocation10 [shape = 's32[1]{0}', space=sflag, size = 0x4, scoped, tag = 'scoped memory for tpu_custom_call.1']
    #allocation11 [shape = 'u8[512]{0}', space=vmem, size = 0x400, scoped, tag = 'output window, operand 0, single buffered']
    %15 = vsyncpa [#allocation4], 0
    %16 = vsyncpa [#allocation7], 0
    %17 = vsyncpa [#allocation10], 0
    %18 = vsyncpa [#allocation5], 0
    // Predicated region
    $region2: #{tpu_custom_call.1} parent=1 // pred_check
      _
    $region3: #{tpu_custom_call.1} parent=1 // pred_check_branch
      %20 = sbr.rel (0) target = $region5
    $region4: #{tpu_custom_call.1} parent=1 // pred_region
      %s22 = ssub.s32 128, 128
      %23 = vsyncadd [#allocation4], %s22
      %s25 = sshll.u32 [#allocation3], 4
      %s26 = int_to_ptr.vmem [resolvable:$true] %s25
      %28 = dma.hbm_to_vmem [thread:$0]  %s0, 128, %s26, [#allocation4]
    $region5: #{tpu_custom_call.1} parent=1 // pred_fallthru
      _
    // Predicated region
    $region6: #{tpu_custom_call.1} parent=1 // pred_check
      _
    $region7: #{tpu_custom_call.1} parent=1 // pred_check_branch
      %30 = sbr.rel (0) target = $region9
    $region8: #{tpu_custom_call.1} parent=1 // pred_region
      %s32 = ssub.s32 128, 128
      %33 = vsyncadd [#allocation7], %s32
      %s35 = sshll.u32 [#allocation6], 4
      %s36 = int_to_ptr.vmem [resolvable:$true] %s35
      %38 = dma.hbm_to_vmem [thread:$0]  %s1, 128, %s36, [#allocation7]
    $region9: #{tpu_custom_call.1} parent=1 // pred_fallthru
      _
    // Predicated region
    $region10: #{tpu_custom_call.1} parent=1 // pred_check
      _
    $region11: #{tpu_custom_call.1} parent=1 // pred_check_branch
      %40 = sbr.rel (0) target = $region13
    $region12: #{tpu_custom_call.1} parent=1 // pred_region
      %s42 = ssub.s32 128, 128
      %43 = vsyncadd [#allocation7], %s42
      %s44 = sshll.u32 [#allocation8], 4
      %s45 = int_to_ptr.vmem [resolvable:$true] %s44
      %50 = dma.hbm_to_vmem [thread:$0]  %s2, 128, %s45, [#allocation7], 64, 64, 4
    $region13: #{tpu_custom_call.1} parent=1 // pred_fallthru
      _
    // Predicated region
    $region14: #{tpu_custom_call.1} parent=1 // pred_check
      _
    $region15: #{tpu_custom_call.1} parent=1 // pred_check_branch
      %52 = sbr.rel (0) target = $region17
    $region16: #{tpu_custom_call.1} parent=1 // pred_region
      _
    $region17: #{tpu_custom_call.1} parent=1 // pred_fallthru
      _
    // Predicated region
    $region18: #{tpu_custom_call.1} parent=1 // pred_check
      _
    $region19: #{tpu_custom_call.1} parent=1 // pred_check_branch
      %54 = sbr.rel (0) target = $region21
    $region20: #{tpu_custom_call.1} parent=1 // pred_region
      _
    $region21: #{tpu_custom_call.1} parent=1 // pred_fallthru
      _
    // Predicated region
    $region22: #{tpu_custom_call.1} parent=1 // pred_check
      _
    $region23: #{tpu_custom_call.1} parent=1 // pred_check_branch
      %56 = sbr.rel (0) target = $region25
    $region24: #{tpu_custom_call.1} parent=1 // pred_region
      %s58 = ssub.s32 256, 256
      %59 = vsyncadd [#allocation10], %s58
      %s60 = sshll.u32 [#allocation9], 4
      %s61 = int_to_ptr.vmem [resolvable:$true] %s60
      %66 = dma.hbm_to_vmem [thread:$0]  %s5, 256, %s61, [#allocation10], 64, 64, 4
    $region25: #{tpu_custom_call.1} parent=1 // pred_fallthru
      _
    // Predicated region
    $region26: #{tpu_custom_call.1} parent=1 // pred_check
      _
    $region27: #{tpu_custom_call.1} parent=1 // pred_check_branch
      %68 = sbr.rel (0) target = $region29
    $region28: #{tpu_custom_call.1} parent=1 // pred_region
      _
    $region29: #{tpu_custom_call.1} parent=1 // pred_fallthru
      _
    // Predicated region
    $region30: #{tpu_custom_call.1} parent=1 // pred_check
      _
    $region31: #{tpu_custom_call.1} parent=1 // pred_check_branch
      %70 = sbr.rel (0) target = $region33
    $region32: #{tpu_custom_call.1} parent=1 // pred_region
      _
    $region33: #{tpu_custom_call.1} parent=1 // pred_fallthru
      _
    // Predicated region
    $region34: #{tpu_custom_call.1} parent=1 // pred_check
      _
    $region35: #{tpu_custom_call.1} parent=1 // pred_check_branch
      %72 = sbr.rel (0) target = $region37
    $region36: #{tpu_custom_call.1} parent=1 // pred_region
      _
    $region37: #{tpu_custom_call.1} parent=1 // pred_fallthru
      _
    // Predicated region
    $region38: #{tpu_custom_call.1} parent=1 // pred_check
      _
    $region39: #{tpu_custom_call.1} parent=1 // pred_check_branch
      %74 = sbr.rel (0) target = $region41
    $region40: #{tpu_custom_call.1} parent=1 // pred_region
      %75 = dma.done [#allocation4], 128
    $region41: #{tpu_custom_call.1} parent=1 // pred_fallthru
      _
    // Predicated region
    $region42: #{tpu_custom_call.1} parent=1 // pred_check
      _
    $region43: #{tpu_custom_call.1} parent=1 // pred_check_branch
      %77 = sbr.rel (0) target = $region45
    $region44: #{tpu_custom_call.1} parent=1 // pred_region
      %78 = dma.done [#allocation7], 128
    $region45: #{tpu_custom_call.1} parent=1 // pred_fallthru
      _
    // Predicated region
    $region46: #{tpu_custom_call.1} parent=1 // pred_check
      _
    $region47: #{tpu_custom_call.1} parent=1 // pred_check_branch
      %80 = sbr.rel (0) target = $region49
    $region48: #{tpu_custom_call.1} parent=1 // pred_region
      %81 = dma.done [#allocation7], 128
    $region49: #{tpu_custom_call.1} parent=1 // pred_fallthru
      _
    // Predicated region
    $region50: #{tpu_custom_call.1} parent=1 // pred_check
      _
    $region51: #{tpu_custom_call.1} parent=1 // pred_check_branch
      %83 = sbr.rel (0) target = $region53
    $region52: #{tpu_custom_call.1} parent=1 // pred_region
      %84 = dma.done [#allocation10], 256
    $region53: #{tpu_custom_call.1} parent=1 // pred_fallthru
      _
    %v86 = vld [vmem:[#allocation3] sm:$0xff]
    %v87 = vpack.c.bf16 %v86, %v86
    %v88 = vld [vmem:[#allocation8] sm:$0xf]
    %v89 = vld [vmem:[#allocation8 + $0x4] sm:$0xf]
    %v90 = vld [vmem:[#allocation6] sm:$0xff]
    %v91 = vpack.c.bf16 %v90, %v90
    %v92 = vld [vmem:[%s3] sm:$0xf]
    %vm93 = vcmask 64512
    %v95 = vsel %vm93, %v91, 0
    %vm97 = vcmask 1043456
    %v99 = vsel %vm97, %v92, 0
    %101 = vmatprep.subr.bf16.mxu0 0
    %102 = vmatpush1.bf16.msra.mxu0 0
    %103 = vmatprep.subr.bf16.mxu0 0
    %104 = vmatpush1.bf16.msra.mxu0 0
    %105 = vmatprep.subr.bf16.mxu0 0
    %106 = vmatpush1.bf16.msra.mxu0 0
    %107 = vmatprep.subr.bf16.mxu0 0
    %108 = vmatpush1.bf16.msra.mxu0 0
    %109 = vmatprep.subr.bf16.mxu0 0
    %110 = vmatpush1.bf16.msra.mxu0 0
    %111 = vmatprep.subr.bf16.mxu0 0
    %112 = vmatpush1.bf16.msra.mxu0 0
    %113 = vmatprep.subr.bf16.mxu0 0
    %114 = vmatpush1.bf16.msra.mxu0 0
    %115 = vmatprep.subr.bf16.mxu0 0
    %116 = vmatpush1.bf16.msra.mxu0 %v99
    %117 = vmatprep.subr.bf16.mxu0 0
    %118 = vmatpush2.bf16.msra.mxu0 0
    %119 = vmatprep.subr.bf16.mxu0 0
    %120 = vmatpush2.bf16.msra.mxu0 0
    %121 = vmatprep.subr.bf16.mxu0 0
    %122 = vmatpush2.bf16.msra.mxu0 0
    %123 = vmatprep.subr.bf16.mxu0 0
    %124 = vmatpush2.bf16.msra.mxu0 0
    %125 = vmatprep.subr.bf16.mxu0 0
    %126 = vmatpush2.bf16.msra.mxu0 0
    %127 = vmatprep.subr.bf16.mxu0 0
    %128 = vmatpush2.bf16.msra.mxu0 0
    %129 = vmatprep.subr.bf16.mxu0 0
    %130 = vmatpush2.bf16.msra.mxu0 0
    %131 = vmatprep.subr.bf16.mxu0 0
    %132 = vmatpush2.bf16.msra.mxu0 0
    %133 = vmatprep.mubr.bf16.mxu0 0
    %134 = vmatmul.mubr.bf16.gmra.mxu0 %v95
    %v135 = vpop.f32.mrf.mxu0
    %v136 = vadd.f32 0.0, %v135
    %v137 = vpop.f32.mrf.mxu0
    %v138 = vpop.f32.mrf.mxu0
    %v139 = vpop.f32.mrf.mxu0
    %140 = vdwg.mxu0
    %v143 = vunpack.c.l.b16 %v88
    %v144 = vunpack.c.l.b16 %v89
    %v145 = vpack.c.b16 %v144, %v143
    %vm147 = vcmask 130048
    %v149 = vsel %vm147, %v87, 0
    %151 = vmatprep.subr.bf16.mxu0 0
    %152 = vmatpush1.bf16.msra.mxu0 0
    %153 = vmatprep.subr.bf16.mxu0 0
    %154 = vmatpush1.bf16.msra.mxu0 0
    %155 = vmatprep.subr.bf16.mxu0 0
    %156 = vmatpush1.bf16.msra.mxu0 0
    %157 = vmatprep.subr.bf16.mxu0 0
    %158 = vmatpush1.bf16.msra.mxu0 0
    %159 = vmatprep.subr.bf16.mxu0 0
    %160 = vmatpush1.bf16.msra.mxu0 0
    %161 = vmatprep.subr.bf16.mxu0 0
    %162 = vmatpush1.bf16.msra.mxu0 0
    %163 = vmatprep.subr.bf16.mxu0 0
    %164 = vmatpush1.bf16.msra.mxu0 0
    %165 = vmatprep.subr.bf16.mxu0 0
    %166 = vmatpush1.bf16.msra.mxu0 %v145
    %167 = vmatprep.subr.bf16.mxu0 0
    %168 = vmatpush2.bf16.msra.mxu0 0
    %169 = vmatprep.subr.bf16.mxu0 0
    %170 = vmatpush2.bf16.msra.mxu0 0
    %171 = vmatprep.subr.bf16.mxu0 0
    %172 = vmatpush2.bf16.msra.mxu0 0
    %173 = vmatprep.subr.bf16.mxu0 0
    %174 = vmatpush2.bf16.msra.mxu0 0
    %175 = vmatprep.subr.bf16.mxu0 0
    %176 = vmatpush2.bf16.msra.mxu0 0
    %177 = vmatprep.subr.bf16.mxu0 0
    %178 = vmatpush2.bf16.msra.mxu0 0
    %179 = vmatprep.subr.bf16.mxu0 0
    %180 = vmatpush2.bf16.msra.mxu0 0
    %181 = vmatprep.subr.bf16.mxu0 0
    %182 = vmatpush2.bf16.msra.mxu0 0
    %183 = vmatprep.mubr.bf16.mxu0 0
    %184 = vmatmul.mubr.bf16.gmra.mxu0 %v149
    %v185 = vpop.f32.mrf.mxu0
    %v186 = vadd.f32 %v136, %v185
    %v187 = vpop.f32.mrf.mxu0
    %v188 = vpop.f32.mrf.mxu0
    %v189 = vpop.f32.mrf.mxu0
    %190 = vdwg.mxu0
    %v191 = vld [vmem:[%s4] sm:$0x1]
    %v193 = vlaneseq
    %v194 = vshrl.u32 %v193, 7
    %v195 = vsub.s32 0, %v194
    %v196 = vrot.slane %v191, %v195
    %v198 = vadd.f32 %v186, %v196
    %v199 = vmax.f32 %v198, 0.0
    %v200 = vpack.c.bf16 %v199, %v199
    %v201 = vld [vmem:[#allocation9] sm:$0xf]
    %v202 = vld [vmem:[#allocation9 + $0x4] sm:$0xf]
    %v203 = vld [vmem:[#allocation9 + $0x8] sm:$0xf]
    %v204 = vld [vmem:[#allocation9 + $0xc] sm:$0xf]
    %v205 = vld [vmem:[%s6] sm:$0x1]
    %v207 = vlaneseq
    %v208 = vshrl.u32 %v207, 7
    %v209 = vsub.s32 0, %v208
    %v210 = vrot.slane %v205, %v209
    %v216 = vunpack.c.l.b16 %v201
    %v217 = vunpack.c.l.b16 %v202
    %v218 = vunpack.c.l.b16 %v203
    %v219 = vunpack.c.l.b16 %v204
    %v220 = vpack.c.b16 %v217, %v216
    %v221 = vpack.c.b16 %v219, %v218
    %vm224 = vcmask 261120
    %v226 = vsel %vm224, %v200, 0
    %228 = vmatprep.subr.bf16.mxu0 0
    %229 = vmatpush1.bf16.msra.mxu0 0
    %230 = vmatprep.subr.bf16.mxu0 0
    %231 = vmatpush1.bf16.msra.mxu0 0
    %232 = vmatprep.subr.bf16.mxu0 0
    %233 = vmatpush1.bf16.msra.mxu0 0
    %234 = vmatprep.subr.bf16.mxu0 0
    %235 = vmatpush1.bf16.msra.mxu0 0
    %236 = vmatprep.subr.bf16.mxu0 0
    %237 = vmatpush1.bf16.msra.mxu0 0
    %238 = vmatprep.subr.bf16.mxu0 0
    %239 = vmatpush1.bf16.msra.mxu0 0
    %240 = vmatprep.subr.bf16.mxu0 0
    %241 = vmatpush1.bf16.msra.mxu0 %v221
    %242 = vmatprep.subr.bf16.mxu0 0
    %243 = vmatpush1.bf16.msra.mxu0 %v220
    %244 = vmatprep.subr.bf16.mxu0 0
    %245 = vmatpush2.bf16.msra.mxu0 0
    %246 = vmatprep.subr.bf16.mxu0 0
    %247 = vmatpush2.bf16.msra.mxu0 0
    %248 = vmatprep.subr.bf16.mxu0 0
    %249 = vmatpush2.bf16.msra.mxu0 0
    %250 = vmatprep.subr.bf16.mxu0 0
    %251 = vmatpush2.bf16.msra.mxu0 0
    %252 = vmatprep.subr.bf16.mxu0 0
    %253 = vmatpush2.bf16.msra.mxu0 0
    %254 = vmatprep.subr.bf16.mxu0 0
    %255 = vmatpush2.bf16.msra.mxu0 0
    %256 = vmatprep.subr.bf16.mxu0 0
    %257 = vmatpush2.bf16.msra.mxu0 0
    %258 = vmatprep.subr.bf16.mxu0 0
    %259 = vmatpush2.bf16.msra.mxu0 0
    %260 = vmatprep.mubr.bf16.mxu0 0
    %261 = vmatmul.mubr.bf16.gmra.mxu0 %v226
    %v262 = vpop.f32.mrf.mxu0
    %v263 = vadd.f32 %v210, %v262
    %v264 = vpop.f32.mrf.mxu0
    %v265 = vpop.f32.mrf.mxu0
    %v266 = vpop.f32.mrf.mxu0
    %267 = vdwg.mxu0
    %v268 = vmax.f32 %v263, 0.0
    %v269 = vld [vmem:[%s7] sm:$0x1]
    %v271 = vlaneseq
    %v272 = vshrl.u32 %v271, 7
    %v273 = vsub.s32 0, %v272
    %v274 = vrot.slane %v269, %v273
    %v276 = vmul.f32 %v268, %v274
    %v277 = vsel %vm224, %v276, 0.0
    %278 = vadd.xlane.f32.xlu0 %v277
    %v279 = vpop.xlane.xlu0 %278
    %s280 = sld [smem:[#allocation2]]
    %v281 = vstv %s280
    %v282 = vadd.f32 %v279, %v281
    %v284 = vlaneseq
    %v285 = vand.u32 %v284, 127
    %v286 = vlaneseq
    %v287 = vshrl.u32 %v286, 7
    %v288 = vsub.s32 %v285, %v287
    %v289 = vrot.slane %v282, %v288
    %vm291 = vcmask 57344
    %292 = vst.msk [vmem:[#allocation11] sm:$0x1] %vm291, %v289
    // Predicated region
    $region54: #{tpu_custom_call.1} parent=1 // pred_check
      _
    $region55: #{tpu_custom_call.1} parent=1 // pred_check_branch
      %294 = sbr.rel (0) target = $region57
    $region56: #{tpu_custom_call.1} parent=1 // pred_region
      %s296 = ssub.s32 16, 16
      %297 = vsyncadd [#allocation5], %s296
      %s299 = sshll.u32 [#allocation11], 4
      %s300 = int_to_ptr.vmem [resolvable:$true] %s299
      %302 = dma.vmem_to_hbm [thread:$0]  %s300, 16, %s9, [#allocation5]
    $region57: #{tpu_custom_call.1} parent=1 // pred_fallthru
      _
    // Predicated region
    $region58: #{tpu_custom_call.1} parent=1 // pred_check
      _
    $region59: #{tpu_custom_call.1} parent=1 // pred_check_branch
      %304 = sbr.rel (0) target = $region61
    $region60: #{tpu_custom_call.1} parent=1 // pred_region
      %305 = dma.done [#allocation5], 16
    $region61: #{tpu_custom_call.1} parent=1 // pred_fallthru
      _
    %306 = vsyncpa [#allocation4], 1
    %307 = vsyncpa [#allocation7], 1
    %308 = vsyncpa [#allocation10], 1
    %309 = vsyncpa [#allocation5], 1

</llo_original>
